<compile_context>
chip_gen: v7x
topology: tpu7x:2x2x1
jax: 0.10.0
libtpu: 0.0.40
codegen_flags: <defaults>
</compile_context>

<pallas_src>
import functools

import jax
import jax.numpy as jnp
import numpy as np
from jax import lax
from jax.experimental import pallas as pl
from jax.experimental.pallas import tpu as pltpu

HIST_LEN = 10
LANE = 128
MAX_TILE_R = 2048   # 2048x128 f32 = 1 MiB per input buffer (x2 inputs x2 bufs = 4 MiB)
CHUNK_R = 256       # rows processed per unrolled inner iteration


def _round_up(x, m):
    return ((x + m - 1) // m) * m


def _fold_rows(x, rows):
    """Sum a (rows, LANE) f32 block down to (8, LANE) with static tile-aligned
    slices (pure VPU adds, no reshapes / cross-lane work)."""
    acc = x[0:8, :]
    for k in range(1, rows // 8):
        acc = acc + x[k * 8:(k + 1) * 8, :]
    return acc


# --------------------------------------------------------------------------- #
# Pallas kernel: density-weighted regression loss partial sums
# --------------------------------------------------------------------------- #
def _dense_loss_kernel(yp_ref, yg_ref, sw_ref, swd_ref, *,
                       thresholds, weights, tile_r, chunk_r):
    """yp_ref/yg_ref: (tile_r, LANE) tiles in VMEM.
    sw_ref/swd_ref: (8, LANE) f32 output accumulators, resident across the
    reduction grid axis (index_map returns the same block for every step of
    grid axis 1), one block per 'parallel' part (axis 0)."""

    @pl.when(pl.program_id(1) == 0)
    def _():
        sw_ref[...] = jnp.zeros_like(sw_ref)
        swd_ref[...] = jnp.zeros_like(swd_ref)

    n_chunks = tile_r // chunk_r

    def body(c, carry):
        aw, awd = carry
        r0 = pl.multiple_of(c * chunk_r, chunk_r)
        yg = yg_ref[pl.ds(r0, chunk_r), :].astype(jnp.float32)
        yp = yp_ref[pl.ds(r0, chunk_r), :].astype(jnp.float32)

        # Bucket -> weight via a threshold chain over the range midpoints.
        # Assigning weights[j] when yg <= thresholds[j], iterating j from high
        # to low, makes the *smallest* satisfying j win -> identical to
        # torch.argmin(|y - ranges|) first-min tie-breaking for ascending
        # ranges, with the cascaded-freq replacement + dens + max(1-a*dens,eps)
        # already folded into `weights` at trace time.
        w = jnp.full(yg.shape, weights[-1], dtype=jnp.float32)
        for j in range(len(thresholds) - 1, -1, -1):
            w = jnp.where(yg <= thresholds[j], weights[j], w)

        d = yg - yp
        wd2 = w * (d * d)
        aw = aw + _fold_rows(w, chunk_r)
        awd = awd + _fold_rows(wd2, chunk_r)
        return aw, awd

    zeros = jnp.zeros((8, LANE), jnp.float32)
    aw, awd = lax.fori_loop(0, n_chunks, body, (zeros, zeros), unroll=True)
    sw_ref[...] += aw
    swd_ref[...] += awd


# --------------------------------------------------------------------------- #
# Trace-time constants: weight table + thresholds (constructor-style, like the
# original pickle'd histogram).  Requires concrete freqs/ranges (not tracers).
# --------------------------------------------------------------------------- #
def make_weight_table(freqs, ranges, alpha, epsilon):
    freqs = np.asarray(freqs)
    ranges = np.asarray(ranges, dtype=np.float32)
    n = int(ranges.shape[0])
    # Reproduce get_dens_target's *sequential* in-place replacement exactly
    # (freqs[idx] values may collide with later bucket indices):
    #   for idx in range(len(freqs)): closest_idx[closest_idx == idx] = freqs[idx]
    val = np.arange(n, dtype=np.int64)
    for idx in range(n):
        val = np.where(val == idx, np.int64(freqs[idx]), val)
    dens = val.astype(np.float64) / float(np.sum(freqs))
    w = np.maximum(1.0 - float(alpha) * dens, float(epsilon)).astype(np.float32)
    thr = ((ranges[:-1] + ranges[1:]) * np.float32(0.5)).astype(np.float32)
    return tuple(float(x) for x in w), tuple(float(x) for x in thr)


# --------------------------------------------------------------------------- #
# Jitted implementation: slab construction + pallas_call + final scalar math.
# All tiling parameters / tables are static -> one cached executable per shape.
# --------------------------------------------------------------------------- #
@functools.partial(
    jax.jit,
    static_argnames=("weights", "thresholds", "gamma", "n_total", "num_parts",
                     "tiles_per_part", "tile_r", "chunk_r", "in_dtype"))
def _dense_loss_impl(y_pred, y_gt, *, weights, thresholds, gamma, n_total,
                     num_parts, tiles_per_part, tile_r, chunk_r, in_dtype):
    dtype = jnp.dtype(in_dtype)
    padded_rows = num_parts * tiles_per_part * tile_r
    n_padded = padded_rows * LANE

    yp, yg = jnp.broadcast_arrays(y_pred, y_gt)

    def to_slab(x):
        flat = x.reshape(-1).astype(dtype)
        if n_padded != n_total:
            flat = jnp.pad(flat, (0, n_padded - n_total))   # zero padding
        return flat.reshape(padded_rows, LANE)

    yp2, yg2 = to_slab(yp), to_slab(yg)

    kernel = functools.partial(_dense_loss_kernel, thresholds=thresholds,
                               weights=weights, tile_r=tile_r, chunk_r=chunk_r)

    in_map = lambda p, i: (p * tiles_per_part + i, 0)
    out_map = lambda p, i: (p, 0, 0)

    sw, swd = pl.pallas_call(
        kernel,
        out_shape=(jax.ShapeDtypeStruct((num_parts, 8, LANE), jnp.float32),
                   jax.ShapeDtypeStruct((num_parts, 8, LANE), jnp.float32)),
        grid=(num_parts, tiles_per_part),
        in_specs=[pl.BlockSpec((tile_r, LANE), in_map),
                  pl.BlockSpec((tile_r, LANE), in_map)],
        out_specs=(pl.BlockSpec((None, 8, LANE), out_map),
                   pl.BlockSpec((None, 8, LANE), out_map)),
        compiler_params=pltpu.CompilerParams(
            dimension_semantics=("parallel", "arbitrary")),
    )(yp2, yg2)

    # Padded elements have yg = yp = 0: they add 0 to sum(w*d^2) and exactly
    # weights[0] each to sum(w) -> subtract that closed-form compensation.
    pad_comp = float(n_padded - n_total) * weights[0]
    sum_w = jnp.sum(sw) - jnp.float32(pad_comp)
    sum_wd2 = jnp.sum(swd)
    # sum(gamma * (w / mean(w)) * d^2) == gamma * N * sum(w*d^2) / sum(w)
    return jnp.float32(gamma) * jnp.float32(n_total) * sum_wd2 / sum_w


def geneo_dense_loss_pallas(y_pred, y_gt, freqs, ranges, *, alpha, epsilon, gamma):
    weights, thresholds = make_weight_table(freqs, ranges, alpha, epsilon)

    out_shape = jnp.broadcast_shapes(y_pred.shape, y_gt.shape)
    n_total = int(np.prod(out_shape)) if len(out_shape) > 0 else 1

    # Stream bf16 inputs as bf16 (half the HBM bytes); everything else as f32.
    if y_pred.dtype == jnp.bfloat16 and y_gt.dtype == jnp.bfloat16:
        in_dtype, align = "bfloat16", 16
    else:
        in_dtype, align = "float32", 8

    rows = -(-n_total // LANE)
    if rows >= 2 * MAX_TILE_R:
        # 2-way 'parallel' split: uses both TensorCores on v7x, harmless on
        # single-TC v5e/v6e (just an outer sequential loop).
        num_parts, tile_r = 2, MAX_TILE_R
    else:
        num_parts = 1
        tile_r = min(MAX_TILE_R, _round_up(rows, align))
    tiles_per_part = -(-rows // (num_parts * tile_r))
    chunk_r = CHUNK_R if tile_r % CHUNK_R == 0 else tile_r

    return _dense_loss_impl(
        y_pred, y_gt, weights=weights, thresholds=thresholds, gamma=float(gamma),
        n_total=n_total, num_parts=num_parts, tiles_per_part=tiles_per_part,
        tile_r=tile_r, chunk_r=chunk_r, in_dtype=in_dtype)


# --------------------------------------------------------------------------- #
# Plain-JAX glue: histogram estimation (constructor) + scalar regularizers.
# (These act on a handful of scalars / run once at construction -> not kernels.)
# --------------------------------------------------------------------------- #
def hist_frequency_estimation(targets, hist_len=HIST_LEN):
    y = jnp.ravel(targets)
    hist_range = jnp.linspace(0.0, 1.0, hist_len)
    hist_idxs = jnp.argmin(jnp.abs(y[:, None] - hist_range), axis=-1)
    # length= covers the "pad missing ranges with zero" branch of the module.
    hist_count = jnp.bincount(hist_idxs, length=hist_len).astype(jnp.int32)
    return hist_count, hist_range.astype(jnp.float32)


def cvx_loss(cvx_coeffs, last_phi_name, rho):
    reg = jnp.float32(0.0)
    for name, phi in cvx_coeffs.items():
        if name != last_phi_name:
            reg = reg + jax.nn.relu(-phi)
    s_all = jnp.float32(0.0)
    for phi in cvx_coeffs.values():
        s_all = s_all + phi
    reg = reg + jax.nn.relu(-(1.0 - s_all + cvx_coeffs[last_phi_name]))
    return rho * reg


def positive_regularizer(geneo_params, rho):
    reg = jnp.float32(0.0)
    for g in geneo_params.values():
        reg = reg + jax.nn.relu(-g)
    return rho * reg


def geneo_loss_forward(y_pred, y_gt, cvx_coeffs, last_phi_name, geneo_params,
                       freqs, ranges, alpha=1.0, rho=1.0, epsilon=0.1, gamma=1.0):
    dense_loss = geneo_dense_loss_pallas(y_pred, y_gt, freqs, ranges,
                                         alpha=alpha, epsilon=epsilon, gamma=gamma)
    cvx_l = cvx_loss(cvx_coeffs, last_phi_name, rho) if len(cvx_coeffs) > 0 else 0.0
    geneo_l = positive_regularizer(geneo_params, rho) if len(geneo_params) > 0 else 0.0
    return dense_loss + cvx_l + geneo_l


# --------------------------------------------------------------------------- #
# Pure-JAX reference (direct transcription of the PyTorch forward)
# --------------------------------------------------------------------------- #
def geneo_loss_reference(y_pred, y_gt, cvx_coeffs, last_phi_name, geneo_params,
                         freqs, ranges, alpha=1.0, rho=1.0, epsilon=0.1, gamma=1.0):
    yp, yg = jnp.broadcast_arrays(y_pred, y_gt)
    closest = jnp.argmin(jnp.abs(yg[..., None] - ranges), axis=-1).astype(jnp.int32)
    val = closest
    for idx in range(freqs.shape[0]):
        val = jnp.where(val == idx, freqs[idx], val)
    dens = val / jnp.sum(freqs)
    w = jnp.maximum(1.0 - alpha * dens, jnp.full_like(dens, epsilon))
    w = w / jnp.mean(w)
    dense_loss = jnp.sum(gamma * w * (yg - yp) ** 2)
    cvx_l = cvx_loss(cvx_coeffs, last_phi_name, rho) if len(cvx_coeffs) > 0 else 0.0
    geneo_l = positive_regularizer(geneo_params, rho) if len(geneo_params) > 0 else 0.0
    return dense_loss + cvx_l + geneo_l


# --------------------------------------------------------------------------- #
if __name__ == "__main__":
    key = jax.random.PRNGKey(0)
    k1, k2, k3, k4, k5 = jax.random.split(key, 5)

    # Constructor-time histogram estimation (replaces the pickle load).
    # TODO(synk): the original module pickles (freqs, ranges) to disk; file I/O
    # is intentionally omitted — the histogram is recomputed in-script.
    targets = jax.random.uniform(k3, (4, 1, 16, 16), jnp.float32)
    freqs, ranges = hist_frequency_estimation(targets)

    # Deterministic synthetic parameters (ParameterDicts of scalar convex
    # coefficients / GENEO kernel parameters).
    cvx_coeffs = {"phi_cone": jnp.float32(0.4),
                  "phi_cylinder": jnp.float32(-0.05),
                  "phi_neg_sphere": jnp.float32(0.65)}   # last, non-trainable phi_N
    last_phi_name = "phi_neg_sphere"
    geneo_params = {"sigma": jnp.float32(0.8),
                    "radius": jnp.float32(-0.3),
                    "height": jnp.float32(1.2)}

    # Test 1: NCHW shapes exactly like the PyTorch module.
    B, C, H, W = 2, 4, 16, 16
    y_pred = jax.random.uniform(k1, (B, C, H, W), jnp.float32)
    y_gt = jax.random.uniform(k2, (B, C, H, W), jnp.float32)
    loss = jax.block_until_ready(
        geneo_loss_forward(y_pred, y_gt, cvx_coeffs, last_phi_name, geneo_params,
                           freqs, ranges, alpha=1.0, rho=1.0, epsilon=0.1, gamma=1.0))
    ref = jax.block_until_ready(
        geneo_loss_reference(y_pred, y_gt, cvx_coeffs, last_phi_name, geneo_params,
                             freqs, ranges, alpha=1.0, rho=1.0, epsilon=0.1, gamma=1.0))
    np.testing.assert_allclose(np.asarray(loss), np.asarray(ref), rtol=1e-3, atol=1e-3)

    # Test 2: odd sizes + broadcasting -> exercises lane padding and the
    # closed-form padding compensation in the wrapper.
    y_pred2 = jax.random.uniform(k4, (2, 3, 7, 11), jnp.float32)
    y_gt2 = jax.random.uniform(k5, (2, 1, 7, 11), jnp.float32)
    loss2 = jax.block_until_ready(
        geneo_loss_forward(y_pred2, y_gt2, cvx_coeffs, last_phi_name, geneo_params,
                           freqs, ranges, alpha=1.0, rho=1.0, epsilon=0.1, gamma=1.0))
    ref2 = jax.block_until_ready(
        geneo_loss_reference(y_pred2, y_gt2, cvx_coeffs, last_phi_name, geneo_params,
                             freqs, ranges, alpha=1.0, rho=1.0, epsilon=0.1, gamma=1.0))
    np.testing.assert_allclose(np.asarray(loss2), np.asarray(ref2), rtol=1e-3, atol=1e-3)

    print("KERNEL_OK")
</pallas_src>

<mosaic_0001>
module attributes {stable_mosaic.version = 11 : i64} {
  func.func @_dense_loss_kernel(%arg0: i32, %arg1: i32, %arg2: memref<16x128xf32, #tpu.memory_space<vmem>>, %arg3: memref<16x128xf32, #tpu.memory_space<vmem>>, %arg4: memref<1x8x128xf32, #tpu.memory_space<vmem>>, %arg5: memref<1x8x128xf32, #tpu.memory_space<vmem>>) attributes {dimension_semantics = [#tpu.dimension_semantics<parallel>, #tpu.dimension_semantics<arbitrary>], iteration_bounds = array<i64: 1, 1>, scalar_prefetch = 0 : i64, scratch_operands = 0 : i64, tpu.core_type = #tpu.core_type<tc>, window_params = [{transform_indices = @transform_0, window_bounds = array<i64: 16, 128>}, {transform_indices = @transform_1, window_bounds = array<i64: 16, 128>}, {transform_indices = @transform_2, window_bounds = array<i64: 1, 8, 128>}, {transform_indices = @transform_3, window_bounds = array<i64: 1, 8, 128>}]} {
    %c0_i32 = arith.constant 0 : i32
    %0 = arith.cmpi eq, %arg1, %c0_i32 : i32
    %1 = arith.extui %0 : i1 to i32
    %c0_i32_0 = arith.constant 0 : i32
    %2 = arith.cmpi ne, %1, %c0_i32_0 : i32
    scf.if %2 {
      %cst_34 = arith.constant 0.000000e+00 : f32
      %70 = vector.broadcast %cst_34 : f32 to vector<8x128xf32>
      %c0_35 = arith.constant 0 : index
      %c0_36 = arith.constant 0 : index
      %c0_37 = arith.constant 0 : index
      %71 = vector.load %arg4[%c0_35, %c0_36, %c0_37] : memref<1x8x128xf32, #tpu.memory_space<vmem>>, vector<1x8x128xf32>
      %72 = vector.shape_cast %71 : vector<1x8x128xf32> to vector<8x128xf32>
      %73 = vector.shape_cast %70 : vector<8x128xf32> to vector<1x8x128xf32>
      tpu.vector_store %arg4[%c0_35, %c0_36, %c0_37], %73 {strides = array<i32>} : memref<1x8x128xf32, #tpu.memory_space<vmem>>, vector<1x8x128xf32>,
      %cst_38 = arith.constant 0.000000e+00 : f32
      %74 = vector.broadcast %cst_38 : f32 to vector<8x128xf32>
      %c0_39 = arith.constant 0 : index
      %c0_40 = arith.constant 0 : index
      %c0_41 = arith.constant 0 : index
      %75 = vector.load %arg5[%c0_39, %c0_40, %c0_41] : memref<1x8x128xf32, #tpu.memory_space<vmem>>, vector<1x8x128xf32>
      %76 = vector.shape_cast %75 : vector<1x8x128xf32> to vector<8x128xf32>
      %77 = vector.shape_cast %74 : vector<8x128xf32> to vector<1x8x128xf32>
      tpu.vector_store %arg5[%c0_39, %c0_40, %c0_41], %77 {strides = array<i32>} : memref<1x8x128xf32, #tpu.memory_space<vmem>>, vector<1x8x128xf32>,
    } else {
    }
    %cst = arith.constant 0.000000e+00 : f32
    %3 = vector.broadcast %cst : f32 to vector<8x128xf32>
    %c0_i32_1 = arith.constant 0 : i32
    %c16_i32 = arith.constant 16 : i32
    %4 = arith.muli %c0_i32_1, %c16_i32 : i32
    %5 = tpu.assume_multiple %4, 16 : i32
    %6 = arith.index_cast %5 : i32 to index
    %c0 = arith.constant 0 : index
    %7 = vector.load %arg3[%6, %c0] : memref<16x128xf32, #tpu.memory_space<vmem>>, vector<16x128xf32>
    %8 = arith.index_cast %5 : i32 to index
    %c0_2 = arith.constant 0 : index
    %9 = vector.load %arg2[%8, %c0_2] : memref<16x128xf32, #tpu.memory_space<vmem>>, vector<16x128xf32>
    %cst_3 = arith.constant 9.375000e-01 : f32
    %10 = vector.broadcast %cst_3 : f32 to vector<16x128xf32>
    %cst_4 = arith.constant 0.944444418 : f32
    %11 = vector.broadcast %cst_4 : f32 to vector<16x128xf32>
    %12 = arith.cmpf ole, %7, %11 : vector<16x128xf32>
    %cst_5 = arith.constant 0.891601562 : f32
    %13 = vector.broadcast %cst_5 : f32 to vector<16x128xf32>
    %14 = arith.select %12, %13, %10 : vector<16x128xi1>, vector<16x128xf32>
    %cst_6 = arith.constant 0.833333373 : f32
    %15 = vector.broadcast %cst_6 : f32 to vector<16x128xf32>
    %16 = arith.cmpf ole, %7, %15 : vector<16x128xf32>
    %cst_7 = arith.constant 0.892578125 : f32
    %17 = vector.broadcast %cst_7 : f32 to vector<16x128xf32>
    %18 = arith.select %16, %17, %14 : vector<16x128xi1>, vector<16x128xf32>
    %cst_8 = arith.constant 0.722222209 : f32
    %19 = vector.broadcast %cst_8 : f32 to vector<16x128xf32>
    %20 = arith.cmpf ole, %7, %19 : vector<16x128xf32>
    %cst_9 = arith.constant 0.896484375 : f32
    %21 = vector.broadcast %cst_9 : f32 to vector<16x128xf32>
    %22 = arith.select %20, %21, %18 : vector<16x128xi1>, vector<16x128xf32>
    %cst_10 = arith.constant 0.611111164 : f32
    %23 = vector.broadcast %cst_10 : f32 to vector<16x128xf32>
    %24 = arith.cmpf ole, %7, %23 : vector<16x128xf32>
    %cst_11 = arith.constant 0.901367187 : f32
    %25 = vector.broadcast %cst_11 : f32 to vector<16x128xf32>
    %26 = arith.select %24, %25, %22 : vector<16x128xi1>, vector<16x128xf32>
    %cst_12 = arith.constant 5.000000e-01 : f32
    %27 = vector.broadcast %cst_12 : f32 to vector<16x128xf32>
    %28 = arith.cmpf ole, %7, %27 : vector<16x128xf32>
    %cst_13 = arith.constant 0.888671875 : f32
    %29 = vector.broadcast %cst_13 : f32 to vector<16x128xf32>
    %30 = arith.select %28, %29, %26 : vector<16x128xi1>, vector<16x128xf32>
    %cst_14 = arith.constant 0.388888896 : f32
    %31 = vector.broadcast %cst_14 : f32 to vector<16x128xf32>
    %32 = arith.cmpf ole, %7, %31 : vector<16x128xf32>
    %cst_15 = arith.constant 0.875976562 : f32
    %33 = vector.broadcast %cst_15 : f32 to vector<16x128xf32>
    %34 = arith.select %32, %33, %30 : vector<16x128xi1>, vector<16x128xf32>
    %cst_16 = arith.constant 0.277777791 : f32
    %35 = vector.broadcast %cst_16 : f32 to vector<16x128xf32>
    %36 = arith.cmpf ole, %7, %35 : vector<16x128xf32>
    %cst_17 = arith.constant 0.88671875 : f32
    %37 = vector.broadcast %cst_17 : f32 to vector<16x128xf32>
    %38 = arith.select %36, %37, %34 : vector<16x128xi1>, vector<16x128xf32>
    %cst_18 = arith.constant 0.166666672 : f32
    %39 = vector.broadcast %cst_18 : f32 to vector<16x128xf32>
    %40 = arith.cmpf ole, %7, %39 : vector<16x128xf32>
    %cst_19 = arith.constant 0.88671875 : f32
    %41 = vector.broadcast %cst_19 : f32 to vector<16x128xf32>
    %42 = arith.select %40, %41, %38 : vector<16x128xi1>, vector<16x128xf32>
    %cst_20 = arith.constant 0.055555556 : f32
    %43 = vector.broadcast %cst_20 : f32 to vector<16x128xf32>
    %44 = arith.cmpf ole, %7, %43 : vector<16x128xf32>
    %cst_21 = arith.constant 0.942382812 : f32
    %45 = vector.broadcast %cst_21 : f32 to vector<16x128xf32>
    %46 = arith.select %44, %45, %42 : vector<16x128xi1>, vector<16x128xf32>
    %47 = arith.subf %7, %9 : vector<16x128xf32>
    %48 = arith.mulf %47, %47 : vector<16x128xf32>
    %49 = arith.mulf %46, %48 : vector<16x128xf32>
    %50 = vector.extract_strided_slice %46 {offsets = [0, 0], sizes = [8, 128], strides = [1, 1]} : vector<16x128xf32> to vector<8x128xf32>
    %51 = vector.extract_strided_slice %46 {offsets = [8, 0], sizes = [8, 128], strides = [1, 1]} : vector<16x128xf32> to vector<8x128xf32>
    %52 = arith.addf %50, %51 : vector<8x128xf32>
    %53 = arith.addf %3, %52 : vector<8x128xf32>
    %54 = vector.extract_strided_slice %49 {offsets = [0, 0], sizes = [8, 128], strides = [1, 1]} : vector<16x128xf32> to vector<8x128xf32>
    %55 = vector.extract_strided_slice %49 {offsets = [8, 0], sizes = [8, 128], strides = [1, 1]} : vector<16x128xf32> to vector<8x128xf32>
    %56 = arith.addf %54, %55 : vector<8x128xf32>
    %57 = arith.addf %3, %56 : vector<8x128xf32>
    %c1_i32 = arith.constant 1 : i32
    %c0_22 = arith.constant 0 : index
    %c0_23 = arith.constant 0 : index
    %c0_24 = arith.constant 0 : index
    %58 = vector.load %arg4[%c0_22, %c0_23, %c0_24] : memref<1x8x128xf32, #tpu.memory_space<vmem>>, vector<1x8x128xf32>
    %59 = vector.shape_cast %58 : vector<1x8x128xf32> to vector<8x128xf32>
    %60 = arith.addf %59, %53 : vector<8x128xf32>
    %c0_25 = arith.constant 0 : index
    %c0_26 = arith.constant 0 : index
    %c0_27 = arith.constant 0 : index
    %61 = vector.load %arg4[%c0_25, %c0_26, %c0_27] : memref<1x8x128xf32, #tpu.memory_space<vmem>>, vector<1x8x128xf32>
    %62 = vector.shape_cast %61 : vector<1x8x128xf32> to vector<8x128xf32>
    %63 = vector.shape_cast %60 : vector<8x128xf32> to vector<1x8x128xf32>
    tpu.vector_store %arg4[%c0_25, %c0_26, %c0_27], %63 {strides = array<i32>} : memref<1x8x128xf32, #tpu.memory_space<vmem>>, vector<1x8x128xf32>,
    %c0_28 = arith.constant 0 : index
    %c0_29 = arith.constant 0 : index
    %c0_30 = arith.constant 0 : index
    %64 = vector.load %arg5[%c0_28, %c0_29, %c0_30] : memref<1x8x128xf32, #tpu.memory_space<vmem>>, vector<1x8x128xf32>
    %65 = vector.shape_cast %64 : vector<1x8x128xf32> to vector<8x128xf32>
    %66 = arith.addf %65, %57 : vector<8x128xf32>
    %c0_31 = arith.constant 0 : index
    %c0_32 = arith.constant 0 : index
    %c0_33 = arith.constant 0 : index
    %67 = vector.load %arg5[%c0_31, %c0_32, %c0_33] : memref<1x8x128xf32, #tpu.memory_space<vmem>>, vector<1x8x128xf32>
    %68 = vector.shape_cast %67 : vector<1x8x128xf32> to vector<8x128xf32>
    %69 = vector.shape_cast %66 : vector<8x128xf32> to vector<1x8x128xf32>
    tpu.vector_store %arg5[%c0_31, %c0_32, %c0_33], %69 {strides = array<i32>} : memref<1x8x128xf32, #tpu.memory_space<vmem>>, vector<1x8x128xf32>,
    return
  }
  func.func @transform_0(%arg0: i32, %arg1: i32) -> (i32, i32) {
    %c1_i32 = arith.constant 1 : i32
    %0 = arith.muli %arg0, %c1_i32 : i32
    %1 = arith.addi %0, %arg1 : i32
    %c0_i32 = arith.constant 0 : i32
    %c0_i32_0 = arith.constant 0 : i32
    return %1, %c0_i32 : i32, i32
  }
  func.func @transform_1(%arg0: i32, %arg1: i32) -> (i32, i32) {
    %c1_i32 = arith.constant 1 : i32
    %0 = arith.muli %arg0, %c1_i32 : i32
    %1 = arith.addi %0, %arg1 : i32
    %c0_i32 = arith.constant 0 : i32
    %c0_i32_0 = arith.constant 0 : i32
    return %1, %c0_i32 : i32, i32
  }
  func.func @transform_2(%arg0: i32, %arg1: i32) -> (i32, i32, i32) {
    %c0_i32 = arith.constant 0 : i32
    %c0_i32_0 = arith.constant 0 : i32
    %c0_i32_1 = arith.constant 0 : i32
    return %arg0, %c0_i32, %c0_i32_0 : i32, i32, i32
  }
  func.func @transform_3(%arg0: i32, %arg1: i32) -> (i32, i32, i32) {
    %c0_i32 = arith.constant 0 : i32
    %c0_i32_0 = arith.constant 0 : i32
    %c0_i32_1 = arith.constant 0 : i32
    return %arg0, %c0_i32, %c0_i32_0 : i32, i32, i32
  }
}

</mosaic_0001>

<llo_original>
// kernel: _dense_loss_impl.1
$region0: #{_dense_loss_impl.1}
  #allocation0 [shape = 'u32[]', space=smem, size = 0x4, offset = 0x4, fixed_abs, tag = 'smem constant byte address 0x4 - core index']
  #allocation1 [shape = 'u32[144,128]{1,0:T(1,128)}', space=vmem, size = 0x12000, scoped, tag = 'internal scratch']
  %s0 = inlined_call_operand.vmem [shape: f32[16,128], index: 0, kind: input, shape index: {}]
  %s1 = inlined_call_operand.vmem [shape: f32[16,128], index: 1, kind: input, shape index: {}]
  %s2 = inlined_call_operand.vmem [shape: f32[1,8,128], index: 2, kind: output, shape index: {0}]
  %s3 = inlined_call_operand.vmem [shape: f32[1,8,128], index: 3, kind: output, shape index: {1}]
  %4 = xla_tuple %s2, %s3
  %s5 = sld [smem:[#allocation0]]
  $region30: #{_dense_loss_impl.1} parent=0
    _
  %s7 = ssub.s32 1, %s5
  %s8 = scalar_select 0, %s7, %s5
  // Predicated region
  $region2: #{_dense_loss_impl.1} parent=0 // pred_check
    _
  $region3: #{_dense_loss_impl.1} parent=0 // pred_check_branch
    %10 = sbr.rel (0) target = $region5
  $region4: #{_dense_loss_impl.1} parent=0 // pred_region
    %s11 = sadd.s32 0, 0
    %s12 = smul.u32 2, %s11
    %p13 = scmp.lt.s32.totalorder %s12, 1
    %s14 = scalar_select %p13, %s12, 1
    %s15 = smul.addr %s14, 8
    %s16 = scalar_lea.vmem %s0, %s15
    %s17 = sadd.s32 0, 0
    %s18 = smul.u32 2, %s17
  $region5: #{_dense_loss_impl.1} parent=0 // pred_fallthru
    _
  // Predicated region
  $region6: #{_dense_loss_impl.1} parent=0 // pred_check
    _
  $region7: #{_dense_loss_impl.1} parent=0 // pred_check_branch
    %20 = sbr.rel (0) target = $region9
  $region8: #{_dense_loss_impl.1} parent=0 // pred_region
    %s21 = sadd.s32 0, 0
    %s22 = smul.u32 2, %s21
    %p23 = scmp.lt.s32.totalorder %s22, 1
    %s24 = scalar_select %p23, %s22, 1
    %s25 = smul.addr %s24, 8
    %s26 = scalar_lea.vmem %s1, %s25
    %s27 = sadd.s32 0, 0
    %s28 = smul.u32 2, %s27
  $region9: #{_dense_loss_impl.1} parent=0 // pred_fallthru
    _
  %s29 = sadd.s32 0, 0
  %s30 = smul.u32 2, %s29
  %p31 = scmp.lt.s32.totalorder %s30, 1
  %s32 = scalar_select %p31, %s30, 1
  %s33 = smul.addr %s32, 8
  %s34 = scalar_lea.vmem %s0, %s33
  %s35 = sadd.s32 0, 0
  %s36 = smul.u32 2, %s35
  %p37 = scmp.lt.s32.totalorder %s36, 1
  %s38 = scalar_select %p37, %s36, 1
  %s39 = smul.addr %s38, 8
  %s40 = scalar_lea.vmem %s1, %s39
  %s41 = sadd.s32 0, 0
  %s42 = smul.u32 2, %s41
  %p43 = scmp.lt.s32.totalorder %s42, 1
  %s44 = scalar_select %p43, %s42, 1
  %s45 = smul.addr %s44, 8
  %s46 = scalar_lea.vmem %s0, %s45
  %s47 = sadd.s32 0, 0
  %s48 = smul.u32 2, %s47
  %s49 = sadd.s32 0, 0
  %s50 = smul.u32 2, %s49
  %p51 = scmp.lt.s32.totalorder %s50, 1
  %s52 = scalar_select %p51, %s50, 1
  %s53 = smul.addr %s52, 8
  %s54 = scalar_lea.vmem %s1, %s53
  %s55 = sadd.s32 0, 0
  %s56 = smul.u32 2, %s55
  %p57 = scmp.eq.s32.totalorder 0, 0
  // Predicated region
  $region10: #{_dense_loss_impl.1} parent=0 // pred_check
    %p58 = pneg %p57
  $region11: #{_dense_loss_impl.1} parent=0 // pred_check_branch
    %60 = sbr.rel (%p58) target = $region13
  $region12: #{_dense_loss_impl.1} parent=0 // pred_region
    %61 = vst [vmem:[%s2] sm:$0xff] 0.0
    %62 = vst [vmem:[%s3] sm:$0xff] 0.0
  $region13: #{_dense_loss_impl.1} parent=0 // pred_fallthru
    _
  %v63 = vld [vmem:[%s54] sm:$0xff]
  %v64 = vld [vmem:[%s54 + $0x8] sm:$0xff]
  %v65 = vld [vmem:[%s46] sm:$0xff]
  %v66 = vld [vmem:[%s46 + $0x8] sm:$0xff]
  %vm67 = vcmp.le.f32.partialorder %v63, 0.9444444
  %vm68 = vcmp.le.f32.partialorder %v64, 0.9444444
  %v69 = vsel %vm67, 0.89160156, 0.9375
  %v70 = vsel %vm68, 0.89160156, 0.9375
  %vm71 = vcmp.le.f32.partialorder %v63, 0.8333334
  %vm72 = vcmp.le.f32.partialorder %v64, 0.8333334
  %v73 = vsel %vm71, 0.8925781, %v69
  %v74 = vsel %vm72, 0.8925781, %v70
  %vm75 = vcmp.le.f32.partialorder %v63, 0.7222222
  %vm76 = vcmp.le.f32.partialorder %v64, 0.7222222
  %v77 = vsel %vm75, 0.8964844, %v73
  %v78 = vsel %vm76, 0.8964844, %v74
  %vm79 = vcmp.le.f32.partialorder %v63, 0.61111116
  %vm80 = vcmp.le.f32.partialorder %v64, 0.61111116
  %v81 = vsel %vm79, 0.9013672, %v77
  %v82 = vsel %vm80, 0.9013672, %v78
  %vm83 = vcmp.le.f32.partialorder %v63, 0.5
  %vm84 = vcmp.le.f32.partialorder %v64, 0.5
  %v85 = vsel %vm83, 0.8886719, %v81
  %v86 = vsel %vm84, 0.8886719, %v82
  %vm87 = vcmp.le.f32.partialorder %v63, 0.3888889
  %vm88 = vcmp.le.f32.partialorder %v64, 0.3888889
  %v89 = vsel %vm87, 0.87597656, %v85
  %v90 = vsel %vm88, 0.87597656, %v86
  %vm91 = vcmp.le.f32.partialorder %v63, 0.2777778
  %vm92 = vcmp.le.f32.partialorder %v64, 0.2777778
  %v93 = vsel %vm91, 0.88671875, %v89
  %v94 = vsel %vm92, 0.88671875, %v90
  %vm95 = vcmp.le.f32.partialorder %v63, 0.16666667
  %vm96 = vcmp.le.f32.partialorder %v64, 0.16666667
  %v97 = vsel %vm95, 0.88671875, %v93
  %v98 = vsel %vm96, 0.88671875, %v94
  %vm99 = vcmp.le.f32.partialorder %v63, 0.055555556
  %vm100 = vcmp.le.f32.partialorder %v64, 0.055555556
  %v101 = vsel %vm99, 0.9423828, %v97
  %v102 = vsel %vm100, 0.9423828, %v98
  %v103 = vsub.f32 %v63, %v65
  %v104 = vsub.f32 %v64, %v66
  %v105 = vmul.f32 %v103, %v103
  %v106 = vmul.f32 %v104, %v104
  %v107 = vmul.f32 %v101, %v105
  %v108 = vmul.f32 %v102, %v106
  %v109 = vadd.f32 %v101, %v102
  %v110 = vadd.f32 %v109, 0.0
  %v111 = vadd.f32 %v107, %v108
  %v112 = vadd.f32 %v111, 0.0
  %v113 = vld [vmem:[%s2] sm:$0xff]
  %v114 = vadd.f32 %v113, %v110
  %115 = vst [vmem:[%s2] sm:$0xff] %v114
  %v116 = vld [vmem:[%s3] sm:$0xff]
  %v117 = vadd.f32 %v116, %v112
  %118 = vst [vmem:[%s3] sm:$0xff] %v117
  // Predicated region
  $region14: #{_dense_loss_impl.1} parent=0 // pred_check
    _
  $region15: #{_dense_loss_impl.1} parent=0 // pred_check_branch
    %120 = sbr.rel (0) target = $region17
  $region16: #{_dense_loss_impl.1} parent=0 // pred_region
    _
  $region17: #{_dense_loss_impl.1} parent=0 // pred_fallthru
    _
  // Predicated region
  $region18: #{_dense_loss_impl.1} parent=0 // pred_check
    _
  $region19: #{_dense_loss_impl.1} parent=0 // pred_check_branch
    %122 = sbr.rel (0) target = $region21
  $region20: #{_dense_loss_impl.1} parent=0 // pred_region
    _
  $region21: #{_dense_loss_impl.1} parent=0 // pred_fallthru
    _
  // Predicated region
  $region22: #{_dense_loss_impl.1} parent=0 // pred_check
    _
  $region23: #{_dense_loss_impl.1} parent=0 // pred_check_branch
    %124 = sbr.rel (0) target = $region25
  $region24: #{_dense_loss_impl.1} parent=0 // pred_region
    _
  $region25: #{_dense_loss_impl.1} parent=0 // pred_fallthru
    _
  // Predicated region
  $region26: #{_dense_loss_impl.1} parent=0 // pred_check
    _
  $region27: #{_dense_loss_impl.1} parent=0 // pred_check_branch
    %126 = sbr.rel (0) target = $region29
  $region28: #{_dense_loss_impl.1} parent=0 // pred_region
    _
  $region29: #{_dense_loss_impl.1} parent=0 // pred_fallthru
    _

</llo_original>
